<compile_context>
chip_gen: v7x
topology: tpu7x:2x2x1
jax: 0.10.0
libtpu: 0.0.40
codegen_flags: <defaults>
</compile_context>

<pallas_src>
import jax
import jax.numpy as jnp
from jax.experimental import pallas as pl
from jax.experimental.pallas import tpu as pltpu

_LANE = 128
_SUBLANE = 8


def emission_kernel(x_ref, w_ref, b_ref, lo_ref, o_ref):
    # Linear: y = x @ W^T + b  (W passed pre-transposed as [in_dim, 6]); f32 accumulation.
    y = jnp.dot(x_ref[...], w_ref[...], preferred_element_type=jnp.float32)
    y = jnp.tanh(y + b_ref[...])                       # bias broadcasts [1, 6] over rows
    # torch.stack([clamp(y[:,0],0,1), y[:,1..5]]): tanh is already in [-1, 1], so a single
    # max against [0, -1, -1, -1, -1, -1] implements the whole clamp/stack.
    o_ref[...] = jnp.maximum(y, lo_ref[...]).astype(o_ref.dtype)


def _round_up(x, m):
    return ((x + m - 1) // m) * m


def _vmem_capacity_bytes():
    try:
        cap = getattr(pltpu.get_tpu_info(), "vmem_capacity_bytes", None)
        if cap:
            return int(cap)
    except Exception:
        pass
    return 64 * 1024 * 1024  # conservative default (v7x per-TensorCore VMEM)


def _pick_tile(in_dim, in_itemsize, out_dim, out_itemsize):
    """VMEM-budgeted batch tile + vmem limit (lane-padding and double-buffer aware)."""
    cap = _vmem_capacity_bytes()                          # 128 MiB v5e/v6e, 64 MiB v7x
    vmem_limit = min((3 * cap) // 4, 96 * 1024 * 1024)    # 96 MiB v5e/v6e, 48 MiB v7x
    budget = vmem_limit - 8 * 1024 * 1024                 # headroom: resident w/b + scratch
    # VMEM bytes per batch row: minor dim padded to 128 lanes, x2 for double buffering,
    # for both the input block and the output block.
    per_row = 2 * (_round_up(in_dim, _LANE) * in_itemsize
                   + _round_up(out_dim, _LANE) * out_itemsize)
    tb = budget // per_row
    tb = min(tb, 1 << 16)                                 # several MB of DMA per step is plenty
    tb = max(_SUBLANE, (tb // _SUBLANE) * _SUBLANE)
    return int(tb), int(vmem_limit)


def emission_net(x, w_t, b, *, block_rows=None):
    """EmissionNet forward.

    x:   [B, in_dim] float (f32 or bf16; bf16 halves HBM read traffic)
    w_t: [in_dim, 6] Linear weight, already transposed
    b:   [6] or [1, 6] Linear bias
    returns [B, 6] float32
    """
    B, D = x.shape
    out_dim = w_t.shape[1]
    out_dtype = jnp.float32

    w_t = w_t.astype(x.dtype)
    b = jnp.asarray(b, jnp.float32).reshape(1, out_dim)
    # Clamp floor: 0 for column 0, -1 elsewhere (no-op since tanh >= -1).
    lo = jnp.concatenate(
        [jnp.zeros((1, 1), jnp.float32),
         jnp.full((1, out_dim - 1), -1.0, jnp.float32)], axis=1)

    auto_tb, vmem_limit = _pick_tile(D, x.dtype.itemsize, out_dim,
                                     jnp.dtype(out_dtype).itemsize)
    tb = auto_tb if block_rows is None else int(block_rows)
    if tb >= B:
        tb = B                                             # single block; equals full dim
    else:
        tb = max(_SUBLANE, (tb // _SUBLANE) * _SUBLANE)    # sublane-aligned tile

    grid = (pl.cdiv(B, tb),)   # no wrapper padding: Pallas masks the ragged last block

    return pl.pallas_call(
        emission_kernel,
        out_shape=jax.ShapeDtypeStruct((B, out_dim), out_dtype),
        grid=grid,
        in_specs=[
            pl.BlockSpec((tb, D), lambda i: (i, 0)),          # batch-tiled activations
            pl.BlockSpec((D, out_dim), lambda i: (0, 0)),     # resident weight
            pl.BlockSpec((1, out_dim), lambda i: (0, 0)),     # resident bias
            pl.BlockSpec((1, out_dim), lambda i: (0, 0)),     # resident clamp floor
        ],
        out_specs=pl.BlockSpec((tb, out_dim), lambda i: (i, 0)),
        compiler_params=pltpu.CompilerParams(
            dimension_semantics=("parallel",),                # shard batch across TCs (v7x)
            vmem_limit_bytes=vmem_limit,
        ),
    )(x, w_t, b, lo)


def make_params(in_dim, dtype=jnp.float32):
    # Deterministic init mirroring EmissionNet.__init__: weight.zero_(), bias=[1,0,0,0,1,0].
    w = jnp.zeros((6, in_dim), dtype=dtype)                   # torch Linear weight [out, in]
    b = jnp.array([1.0, 0.0, 0.0, 0.0, 1.0, 0.0], jnp.float32)
    return w.T, b                                             # pre-transposed for the kernel


if __name__ == "__main__":
    in_dim = 32
    batch = 300   # not a multiple of the test tile -> exercises the ragged last block

    key = jax.random.PRNGKey(0)
    kx, kw = jax.random.split(key)
    # bf16 activations (perf review): halves HBM read traffic; accumulation stays f32.
    x = jax.random.normal(kx, (batch, in_dim), dtype=jnp.bfloat16)

    def reference(x, w_t, b):
        y = jnp.tanh(x.astype(jnp.float32) @ w_t.astype(jnp.float32)
                     + b.reshape(1, -1).astype(jnp.float32))
        return y.at[:, 0].set(jnp.clip(y[:, 0], 0.0, 1.0))

    # 1) Module's deterministic init, auto (VMEM-budgeted) tile -> single block.
    w_t, b = make_params(in_dim, dtype=jnp.bfloat16)
    out = jax.block_until_ready(emission_net(x, w_t, b))
    assert out.shape == (batch, 6) and out.dtype == jnp.float32
    assert jnp.allclose(out, reference(x, w_t, b), atol=1e-4), "mismatch (module init)"

    # 2) Random weights + small explicit tile -> multi-step grid with ragged last block.
    w_rand = (0.3 * jax.random.normal(kw, (in_dim, 6))).astype(jnp.bfloat16)
    b_rand = jnp.array([0.1, -0.2, 0.3, -0.4, 0.5, -0.6], jnp.float32)
    out2 = jax.block_until_ready(emission_net(x, w_rand, b_rand, block_rows=128))
    assert jnp.allclose(out2, reference(x, w_rand, b_rand), atol=1e-4), "mismatch (random init)"

    print("KERNEL_OK")
</pallas_src>

<mosaic_0001>
module attributes {stable_mosaic.version = 11 : i64} {
  func.func @emission_kernel(%arg0: i32, %arg1: memref<300x32xbf16, #tpu.memory_space<vmem>>, %arg2: memref<32x6xbf16, #tpu.memory_space<vmem>>, %arg3: memref<1x6xf32, #tpu.memory_space<vmem>>, %arg4: memref<1x6xf32, #tpu.memory_space<vmem>>, %arg5: memref<300x6xf32, #tpu.memory_space<vmem>>) attributes {dimension_semantics = [#tpu.dimension_semantics<parallel>], iteration_bounds = array<i64: 1>, scalar_prefetch = 0 : i64, scratch_operands = 0 : i64, tpu.core_type = #tpu.core_type<tc>, window_params = [{transform_indices = @transform_0, window_bounds = array<i64: 300, 32>}, {pipeline_mode = #tpu.pipeline_mode<synchronous>, transform_indices = @transform_1, window_bounds = array<i64: 32, 6>}, {pipeline_mode = #tpu.pipeline_mode<synchronous>, transform_indices = @transform_2, window_bounds = array<i64: 1, 6>}, {pipeline_mode = #tpu.pipeline_mode<synchronous>, transform_indices = @transform_3, window_bounds = array<i64: 1, 6>}, {transform_indices = @transform_4, window_bounds = array<i64: 300, 6>}]} {
    %c0 = arith.constant 0 : index
    %c0_0 = arith.constant 0 : index
    %0 = vector.load %arg1[%c0, %c0_0] : memref<300x32xbf16, #tpu.memory_space<vmem>>, vector<300x32xbf16>
    %c0_1 = arith.constant 0 : index
    %c0_2 = arith.constant 0 : index
    %1 = vector.load %arg2[%c0_1, %c0_2] : memref<32x6xbf16, #tpu.memory_space<vmem>>, vector<32x6xbf16>
    %cst = arith.constant dense<0.000000e+00> : vector<300x6xf32>
    %2 = tpu.matmul %0, %1, %cst {dimension_numbers = #tpu.dot_dimension_numbers<[1], [0], [0], [1], [0, 0, 1, 1], [], []>} : vector<300x32xbf16>, vector<32x6xbf16>, vector<300x6xf32> -> vector<300x6xf32>
    %c0_3 = arith.constant 0 : index
    %c0_4 = arith.constant 0 : index
    %3 = vector.load %arg3[%c0_3, %c0_4] : memref<1x6xf32, #tpu.memory_space<vmem>>, vector<1x6xf32>
    %4 = vector.broadcast %3 : vector<1x6xf32> to vector<300x6xf32>
    %5 = arith.addf %2, %4 : vector<300x6xf32>
    %6 = math.tanh %5 : vector<300x6xf32>
    %c0_5 = arith.constant 0 : index
    %c0_6 = arith.constant 0 : index
    %7 = vector.load %arg4[%c0_5, %c0_6] : memref<1x6xf32, #tpu.memory_space<vmem>>, vector<1x6xf32>
    %8 = vector.broadcast %7 : vector<1x6xf32> to vector<300x6xf32>
    %9 = arith.maximumf %6, %8 : vector<300x6xf32>
    %c0_7 = arith.constant 0 : index
    %c0_8 = arith.constant 0 : index
    %10 = vector.load %arg5[%c0_7, %c0_8] : memref<300x6xf32, #tpu.memory_space<vmem>>, vector<300x6xf32>
    tpu.vector_store %arg5[%c0_7, %c0_8], %9 {strides = array<i32>} : memref<300x6xf32, #tpu.memory_space<vmem>>, vector<300x6xf32>,
    return
  }
  func.func @transform_0(%arg0: i32) -> (i32, i32) {
    %c0_i32 = arith.constant 0 : i32
    %c0_i32_0 = arith.constant 0 : i32
    return %arg0, %c0_i32 : i32, i32
  }
  func.func @transform_1(%arg0: i32) -> (i32, i32) {
    %c0_i32 = arith.constant 0 : i32
    %c0_i32_0 = arith.constant 0 : i32
    %c0_i32_1 = arith.constant 0 : i32
    return %c0_i32, %c0_i32_0 : i32, i32
  }
  func.func @transform_2(%arg0: i32) -> (i32, i32) {
    %c0_i32 = arith.constant 0 : i32
    %c0_i32_0 = arith.constant 0 : i32
    %c0_i32_1 = arith.constant 0 : i32
    return %c0_i32, %c0_i32_0 : i32, i32
  }
  func.func @transform_3(%arg0: i32) -> (i32, i32) {
    %c0_i32 = arith.constant 0 : i32
    %c0_i32_0 = arith.constant 0 : i32
    %c0_i32_1 = arith.constant 0 : i32
    return %c0_i32, %c0_i32_0 : i32, i32
  }
  func.func @transform_4(%arg0: i32) -> (i32, i32) {
    %c0_i32 = arith.constant 0 : i32
    %c0_i32_0 = arith.constant 0 : i32
    return %arg0, %c0_i32 : i32, i32
  }
}

</mosaic_0001>

<llo_original>
// kernel: tpu_custom_call.1
$region0: #{tpu_custom_call.1}
  #allocation0 [shape = 'u32[]', space=smem, size = 0x4, offset = 0x4, fixed_abs, tag = 'smem constant byte address 0x4 - core index']
  #allocation1 [shape = 'u32[144,128]{1,0:T(1,128)}', space=vmem, size = 0x12000, scoped, tag = 'internal scratch']
  %s0 = inlined_call_operand.vmem [shape: bf16[300,32], index: 0, kind: input, shape index: {}]
  %s1 = inlined_call_operand.vmem [shape: bf16[32,6], index: 1, kind: input, shape index: {}]
  %s2 = inlined_call_operand.vmem [shape: f32[1,6], index: 2, kind: input, shape index: {}]
  %s3 = inlined_call_operand.vmem [shape: f32[1,6], index: 3, kind: input, shape index: {}]
  %s4 = inlined_call_operand.vmem [shape: f32[300,6], index: 4, kind: output, shape index: {}]
  %s5 = sld [smem:[#allocation0]]
  $region26: #{tpu_custom_call.1} parent=0
    _
  %s7 = ssub.s32 1, %s5
  %s8 = scalar_select 0, %s7, %s5
  // Predicated region
  $region2: #{tpu_custom_call.1} parent=0 // pred_check
    _
  $region3: #{tpu_custom_call.1} parent=0 // pred_check_branch
    %10 = sbr.rel (0) target = $region5
  $region4: #{tpu_custom_call.1} parent=0 // pred_region
    _
  $region5: #{tpu_custom_call.1} parent=0 // pred_fallthru
    _
  // Predicated region
  $region6: #{tpu_custom_call.1} parent=0 // pred_check
    _
  $region7: #{tpu_custom_call.1} parent=0 // pred_check_branch
    %12 = sbr.rel (0) target = $region9
  $region8: #{tpu_custom_call.1} parent=0 // pred_region
    _
  $region9: #{tpu_custom_call.1} parent=0 // pred_fallthru
    _
  // Predicated region
  $region10: #{tpu_custom_call.1} parent=0 // pred_check
    _
  $region11: #{tpu_custom_call.1} parent=0 // pred_check_branch
    %14 = sbr.rel (0) target = $region13
  $region12: #{tpu_custom_call.1} parent=0 // pred_region
    _
  $region13: #{tpu_custom_call.1} parent=0 // pred_fallthru
    _
  // Predicated region
  $region14: #{tpu_custom_call.1} parent=0 // pred_check
    _
  $region15: #{tpu_custom_call.1} parent=0 // pred_check_branch
    %16 = sbr.rel (0) target = $region17
  $region16: #{tpu_custom_call.1} parent=0 // pred_region
    _
  $region17: #{tpu_custom_call.1} parent=0 // pred_fallthru
    _
  %v18 = vld [vmem:[%s0] sm:$0xf]
  %v19 = vld [vmem:[%s0 + $0x4] sm:$0xf]
  %v20 = vld [vmem:[%s0 + $0x8] sm:$0xf]
  %v21 = vld [vmem:[%s0 + $0xc] sm:$0xf]
  %v22 = vld [vmem:[%s0 + $0x10] sm:$0xf]
  %v23 = vld [vmem:[%s0 + $0x14] sm:$0xf]
  %v24 = vld [vmem:[%s0 + $0x18] sm:$0xf]
  %v25 = vld [vmem:[%s0 + $0x1c] sm:$0xf]
  %v26 = vld [vmem:[%s0 + $0x20] sm:$0xf]
  %v27 = vld [vmem:[%s0 + $0x24] sm:$0xf]
  %v28 = vld [vmem:[%s0 + $0x28] sm:$0xf]
  %v29 = vld [vmem:[%s0 + $0x2c] sm:$0xf]
  %v30 = vld [vmem:[%s0 + $0x30] sm:$0xf]
  %v31 = vld [vmem:[%s0 + $0x34] sm:$0xf]
  %v32 = vld [vmem:[%s0 + $0x38] sm:$0xf]
  %v33 = vld [vmem:[%s0 + $0x3c] sm:$0xf]
  %v34 = vld [vmem:[%s0 + $0x40] sm:$0xf]
  %v35 = vld [vmem:[%s0 + $0x44] sm:$0xf]
  %v36 = vld [vmem:[%s0 + $0x48] sm:$0xf]
  %v37 = vld [vmem:[%s0 + $0x4c] sm:$0xf]
  %v38 = vld [vmem:[%s0 + $0x50] sm:$0xf]
  %v39 = vld [vmem:[%s0 + $0x54] sm:$0xf]
  %v40 = vld [vmem:[%s0 + $0x58] sm:$0xf]
  %v41 = vld [vmem:[%s0 + $0x5c] sm:$0xf]
  %v42 = vld [vmem:[%s0 + $0x60] sm:$0xf]
  %v43 = vld [vmem:[%s0 + $0x64] sm:$0xf]
  %v44 = vld [vmem:[%s0 + $0x68] sm:$0xf]
  %v45 = vld [vmem:[%s0 + $0x6c] sm:$0xf]
  %v46 = vld [vmem:[%s0 + $0x70] sm:$0xf]
  %v47 = vld [vmem:[%s0 + $0x74] sm:$0xf]
  %v48 = vld [vmem:[%s0 + $0x78] sm:$0xf]
  %v49 = vld [vmem:[%s0 + $0x7c] sm:$0xf]
  %v50 = vld [vmem:[%s0 + $0x80] sm:$0xf]
  %v51 = vld [vmem:[%s0 + $0x84] sm:$0xf]
  %v52 = vld [vmem:[%s0 + $0x88] sm:$0xf]
  %v53 = vld [vmem:[%s0 + $0x8c] sm:$0xf]
  %v54 = vld [vmem:[%s0 + $0x90] sm:$0xf]
  %v55 = vld [vmem:[%s0 + $0x94] sm:$0x3]
  %v56 = vld [vmem:[%s1] sm:$0xf]
  %v57 = vld [vmem:[%s1 + $0x4] sm:$0xf]
  %v58 = vld [vmem:[%s1 + $0x8] sm:$0xf]
  %v59 = vld [vmem:[%s1 + $0xc] sm:$0xf]
  %v60 = vld [vmem:[%s2] sm:$0x1]
  %v62 = vlaneseq
  %v63 = vshrl.u32 %v62, 7
  %v64 = vsub.s32 0, %v63
  %v65 = vrot.slane %v60, %v64
  %v105 = vunpack.c.l.b16 %v18
  %v106 = vunpack.c.l.b16 %v19
  %v107 = vunpack.c.l.b16 %v20
  %v108 = vunpack.c.l.b16 %v21
  %v109 = vunpack.c.l.b16 %v22
  %v110 = vunpack.c.l.b16 %v23
  %v111 = vunpack.c.l.b16 %v24
  %v112 = vunpack.c.l.b16 %v25
  %v113 = vunpack.c.l.b16 %v26
  %v114 = vunpack.c.l.b16 %v27
  %v115 = vunpack.c.l.b16 %v28
  %v116 = vunpack.c.l.b16 %v29
  %v117 = vunpack.c.l.b16 %v30
  %v118 = vunpack.c.l.b16 %v31
  %v119 = vunpack.c.l.b16 %v32
  %v120 = vunpack.c.l.b16 %v33
  %v121 = vunpack.c.l.b16 %v34
  %v122 = vunpack.c.l.b16 %v35
  %v123 = vunpack.c.l.b16 %v36
  %v124 = vunpack.c.l.b16 %v37
  %v125 = vunpack.c.l.b16 %v38
  %v126 = vunpack.c.l.b16 %v39
  %v127 = vunpack.c.l.b16 %v40
  %v128 = vunpack.c.l.b16 %v41
  %v129 = vunpack.c.l.b16 %v42
  %v130 = vunpack.c.l.b16 %v43
  %v131 = vunpack.c.l.b16 %v44
  %v132 = vunpack.c.l.b16 %v45
  %v133 = vunpack.c.l.b16 %v46
  %v134 = vunpack.c.l.b16 %v47
  %v135 = vunpack.c.l.b16 %v48
  %v136 = vunpack.c.l.b16 %v49
  %v137 = vunpack.c.l.b16 %v50
  %v138 = vunpack.c.l.b16 %v51
  %v139 = vunpack.c.l.b16 %v52
  %v140 = vunpack.c.l.b16 %v53
  %v141 = vunpack.c.l.b16 %v54
  %v142 = vunpack.c.l.b16 %v55
  %v143 = vpack.c.b16 %v106, %v105
  %v144 = vpack.c.b16 %v108, %v107
  %v145 = vpack.c.b16 %v110, %v109
  %v146 = vpack.c.b16 %v112, %v111
  %v147 = vpack.c.b16 %v114, %v113
  %v148 = vpack.c.b16 %v116, %v115
  %v149 = vpack.c.b16 %v118, %v117
  %v150 = vpack.c.b16 %v120, %v119
  %v151 = vpack.c.b16 %v122, %v121
  %v152 = vpack.c.b16 %v124, %v123
  %v153 = vpack.c.b16 %v126, %v125
  %v154 = vpack.c.b16 %v128, %v127
  %v155 = vpack.c.b16 %v130, %v129
  %v156 = vpack.c.b16 %v132, %v131
  %v157 = vpack.c.b16 %v134, %v133
  %v158 = vpack.c.b16 %v136, %v135
  %v159 = vpack.c.b16 %v138, %v137
  %v160 = vpack.c.b16 %v140, %v139
  %v161 = vpack.c.b16 %v142, %v141
  %v166 = vunpack.c.l.b16 %v56
  %v167 = vunpack.c.l.b16 %v57
  %v168 = vunpack.c.l.b16 %v58
  %v169 = vunpack.c.l.b16 %v59
  %v170 = vpack.c.b16 %v167, %v166
  %v171 = vpack.c.b16 %v169, %v168
  %vm174 = vcmask 261120
  %v176 = vsel %vm174, %v143, 0
  %v179 = vsel %vm174, %v144, 0
  %v182 = vsel %vm174, %v145, 0
  %v185 = vsel %vm174, %v146, 0
  %v188 = vsel %vm174, %v147, 0
  %v191 = vsel %vm174, %v148, 0
  %v194 = vsel %vm174, %v149, 0
  %v197 = vsel %vm174, %v150, 0
  %v200 = vsel %vm174, %v151, 0
  %v203 = vsel %vm174, %v152, 0
  %v206 = vsel %vm174, %v153, 0
  %v209 = vsel %vm174, %v154, 0
  %v212 = vsel %vm174, %v155, 0
  %v215 = vsel %vm174, %v156, 0
  %v218 = vsel %vm174, %v157, 0
  %v221 = vsel %vm174, %v158, 0
  %v224 = vsel %vm174, %v159, 0
  %v227 = vsel %vm174, %v160, 0
  %v230 = vsel %vm174, %v161, 0
  %232 = vmatprep.subr.bf16.mxu0 0
  %233 = vmatpush1.bf16.msra.mxu0 %v170
  %234 = vmatprep.subr.bf16.mxu0 0
  %235 = vmatpush1.bf16.msra.mxu0 %v171
  %236 = vmatprep.subr.bf16.mxu0 0
  %237 = vmatpush1.bf16.msra.mxu0 0
  %238 = vmatprep.subr.bf16.mxu0 0
  %239 = vmatpush1.bf16.msra.mxu0 0
  %240 = vmatprep.subr.bf16.mxu0 0
  %241 = vmatpush1.bf16.msra.mxu0 0
  %242 = vmatprep.subr.bf16.mxu0 0
  %243 = vmatpush1.bf16.msra.mxu0 0
  %244 = vmatprep.subr.bf16.mxu0 0
  %245 = vmatpush1.bf16.msra.mxu0 0
  %246 = vmatprep.subr.bf16.mxu0 0
  %247 = vmatpush1.bf16.msra.mxu0 0
  %248 = vmatprep.subr.bf16.mxu0 0
  %249 = vmatpush1.bf16.msra.mxu0 0
  %250 = vmatprep.subr.bf16.mxu0 0
  %251 = vmatpush1.bf16.msra.mxu0 0
  %252 = vmatprep.subr.bf16.mxu0 0
  %253 = vmatpush1.bf16.msra.mxu0 0
  %254 = vmatprep.subr.bf16.mxu0 0
  %255 = vmatpush1.bf16.msra.mxu0 0
  %256 = vmatprep.subr.bf16.mxu0 0
  %257 = vmatpush1.bf16.msra.mxu0 0
  %258 = vmatprep.subr.bf16.mxu0 0
  %259 = vmatpush1.bf16.msra.mxu0 0
  %260 = vmatprep.subr.bf16.mxu0 0
  %261 = vmatpush1.bf16.msra.mxu0 0
  %262 = vmatprep.subr.bf16.mxu0 0
  %263 = vmatpush1.bf16.msra.mxu0 0
  %264 = vmatprep.mubr.bf16.mxu0 0
  %265 = vmatmul.mubr.bf16.gmra.mrb[0].mxu0 %v176
  %v266 = vpop.f32.mrb[0].mxu0
  %v267 = vadd.f32 %v65, %v266
  %v268 = vpop.f32.mrb[0].mxu0
  %v269 = vpop.f32.mrb[0].mxu0
  %v270 = vadd.f32 %v65, %v269
  %v271 = vpop.f32.mrb[0].mxu0
  %272 = vmatprep.mubr.bf16.mxu0 0
  %273 = vmatmul.mubr.bf16.gmra.mrb[0].mxu0 %v179
  %v274 = vpop.f32.mrb[0].mxu0
  %v275 = vadd.f32 %v65, %v274
  %v276 = vpop.f32.mrb[0].mxu0
  %v277 = vpop.f32.mrb[0].mxu0
  %v278 = vadd.f32 %v65, %v277
  %v279 = vpop.f32.mrb[0].mxu0
  %280 = vmatprep.mubr.bf16.mxu0 0
  %281 = vmatmul.mubr.bf16.gmra.mrb[0].mxu0 %v182
  %v282 = vpop.f32.mrb[0].mxu0
  %v283 = vadd.f32 %v65, %v282
  %v284 = vpop.f32.mrb[0].mxu0
  %v285 = vpop.f32.mrb[0].mxu0
  %v286 = vadd.f32 %v65, %v285
  %v287 = vpop.f32.mrb[0].mxu0
  %288 = vmatprep.mubr.bf16.mxu0 0
  %289 = vmatmul.mubr.bf16.gmra.mrb[0].mxu0 %v185
  %v290 = vpop.f32.mrb[0].mxu0
  %v291 = vadd.f32 %v65, %v290
  %v292 = vpop.f32.mrb[0].mxu0
  %v293 = vpop.f32.mrb[0].mxu0
  %v294 = vadd.f32 %v65, %v293
  %v295 = vpop.f32.mrb[0].mxu0
  %296 = vmatprep.mubr.bf16.mxu0 0
  %297 = vmatmul.mubr.bf16.gmra.mrb[0].mxu0 %v188
  %v298 = vpop.f32.mrb[0].mxu0
  %v299 = vadd.f32 %v65, %v298
  %v300 = vpop.f32.mrb[0].mxu0
  %v301 = vpop.f32.mrb[0].mxu0
  %v302 = vadd.f32 %v65, %v301
  %v303 = vpop.f32.mrb[0].mxu0
  %304 = vmatprep.mubr.bf16.mxu0 0
  %305 = vmatmul.mubr.bf16.gmra.mrb[0].mxu0 %v191
  %v306 = vpop.f32.mrb[0].mxu0
  %v307 = vadd.f32 %v65, %v306
  %v308 = vpop.f32.mrb[0].mxu0
  %v309 = vpop.f32.mrb[0].mxu0
  %v310 = vadd.f32 %v65, %v309
  %v311 = vpop.f32.mrb[0].mxu0
  %312 = vmatprep.mubr.bf16.mxu0 0
  %313 = vmatmul.mubr.bf16.gmra.mrb[0].mxu0 %v194
  %v314 = vpop.f32.mrb[0].mxu0
  %v315 = vadd.f32 %v65, %v314
  %v316 = vpop.f32.mrb[0].mxu0
  %v317 = vpop.f32.mrb[0].mxu0
  %v318 = vadd.f32 %v65, %v317
  %v319 = vpop.f32.mrb[0].mxu0
  %320 = vmatprep.mubr.bf16.mxu0 0
  %321 = vmatmul.mubr.bf16.gmra.mrb[0].mxu0 %v197
  %v322 = vpop.f32.mrb[0].mxu0
  %v323 = vadd.f32 %v65, %v322
  %v324 = vpop.f32.mrb[0].mxu0
  %v325 = vpop.f32.mrb[0].mxu0
  %v326 = vadd.f32 %v65, %v325
  %v327 = vpop.f32.mrb[0].mxu0
  %328 = vmatprep.mubr.bf16.mxu0 0
  %329 = vmatmul.mubr.bf16.gmra.mrb[0].mxu0 %v200
  %v330 = vpop.f32.mrb[0].mxu0
  %v331 = vadd.f32 %v65, %v330
  %v332 = vpop.f32.mrb[0].mxu0
  %v333 = vpop.f32.mrb[0].mxu0
  %v334 = vadd.f32 %v65, %v333
  %v335 = vpop.f32.mrb[0].mxu0
  %336 = vmatprep.mubr.bf16.mxu0 0
  %337 = vmatmul.mubr.bf16.gmra.mrb[0].mxu0 %v203
  %v338 = vpop.f32.mrb[0].mxu0
  %v339 = vadd.f32 %v65, %v338
  %v340 = vpop.f32.mrb[0].mxu0
  %v341 = vpop.f32.mrb[0].mxu0
  %v342 = vadd.f32 %v65, %v341
  %v343 = vpop.f32.mrb[0].mxu0
  %344 = vmatprep.mubr.bf16.mxu0 0
  %345 = vmatmul.mubr.bf16.gmra.mrb[0].mxu0 %v206
  %v346 = vpop.f32.mrb[0].mxu0
  %v347 = vadd.f32 %v65, %v346
  %v348 = vpop.f32.mrb[0].mxu0
  %v349 = vpop.f32.mrb[0].mxu0
  %v350 = vadd.f32 %v65, %v349
  %v351 = vpop.f32.mrb[0].mxu0
  %352 = vmatprep.mubr.bf16.mxu0 0
  %353 = vmatmul.mubr.bf16.gmra.mrb[0].mxu0 %v209
  %v354 = vpop.f32.mrb[0].mxu0
  %v355 = vadd.f32 %v65, %v354
  %v356 = vpop.f32.mrb[0].mxu0
  %v357 = vpop.f32.mrb[0].mxu0
  %v358 = vadd.f32 %v65, %v357
  %v359 = vpop.f32.mrb[0].mxu0
  %360 = vmatprep.mubr.bf16.mxu0 0
  %361 = vmatmul.mubr.bf16.gmra.mrb[0].mxu0 %v212
  %v362 = vpop.f32.mrb[0].mxu0
  %v363 = vadd.f32 %v65, %v362
  %v364 = vpop.f32.mrb[0].mxu0
  %v365 = vpop.f32.mrb[0].mxu0
  %v366 = vadd.f32 %v65, %v365
  %v367 = vpop.f32.mrb[0].mxu0
  %368 = vmatprep.mubr.bf16.mxu0 0
  %369 = vmatmul.mubr.bf16.gmra.mrb[0].mxu0 %v215
  %v370 = vpop.f32.mrb[0].mxu0
  %v371 = vadd.f32 %v65, %v370
  %v372 = vpop.f32.mrb[0].mxu0
  %v373 = vpop.f32.mrb[0].mxu0
  %v374 = vadd.f32 %v65, %v373
  %v375 = vpop.f32.mrb[0].mxu0
  %376 = vmatprep.mubr.bf16.mxu0 0
  %377 = vmatmul.mubr.bf16.gmra.mrb[0].mxu0 %v218
  %v378 = vpop.f32.mrb[0].mxu0
  %v379 = vadd.f32 %v65, %v378
  %v380 = vpop.f32.mrb[0].mxu0
  %v381 = vpop.f32.mrb[0].mxu0
  %v382 = vadd.f32 %v65, %v381
  %v383 = vpop.f32.mrb[0].mxu0
  %384 = vmatprep.mubr.bf16.mxu0 0
  %385 = vmatmul.mubr.bf16.gmra.mrb[0].mxu0 %v221
  %v386 = vpop.f32.mrb[0].mxu0
  %v387 = vadd.f32 %v65, %v386
  %v388 = vpop.f32.mrb[0].mxu0
  %v389 = vpop.f32.mrb[0].mxu0
  %v390 = vadd.f32 %v65, %v389
  %v391 = vpop.f32.mrb[0].mxu0
  %392 = vmatprep.mubr.bf16.mxu0 0
  %393 = vmatmul.mubr.bf16.gmra.mrb[0].mxu0 %v224
  %v394 = vpop.f32.mrb[0].mxu0
  %v395 = vadd.f32 %v65, %v394
  %v396 = vpop.f32.mrb[0].mxu0
  %v397 = vpop.f32.mrb[0].mxu0
  %v398 = vadd.f32 %v65, %v397
  %v399 = vpop.f32.mrb[0].mxu0
  %400 = vmatprep.mubr.bf16.mxu0 0
  %401 = vmatmul.mubr.bf16.gmra.mrb[0].mxu0 %v227
  %v402 = vpop.f32.mrb[0].mxu0
  %v403 = vadd.f32 %v65, %v402
  %v404 = vpop.f32.mrb[0].mxu0
  %v405 = vpop.f32.mrb[0].mxu0
  %v406 = vadd.f32 %v65, %v405
  %v407 = vpop.f32.mrb[0].mxu0
  %408 = vmatprep.mubr.bf16.mxu0 0
  %409 = vmatmul.mubr.bf16.gmra.mrb[0].mxu0 %v230
  %v410 = vpop.f32.mrb[0].mxu0
  %v411 = vadd.f32 %v65, %v410
  %v412 = vpop.f32.mrb[0].mxu0
  %v413 = vpop.f32.mrb[0].mxu0
  %v414 = vadd.f32 %v65, %v413
  %v415 = vpop.f32.mrb[0].mxu0
  %416 = vdwg.mxu0
  %v417 = vtanh.pop %v267
  %v418 = vtanh.pop %v270
  %v419 = vtanh.pop %v275
  %v420 = vtanh.pop %v278
  %v421 = vtanh.pop %v283
  %v422 = vtanh.pop %v286
  %v423 = vtanh.pop %v291
  %v424 = vtanh.pop %v294
  %v425 = vtanh.pop %v299
  %v426 = vtanh.pop %v302
  %v427 = vtanh.pop %v307
  %v428 = vtanh.pop %v310
  %v429 = vtanh.pop %v315
  %v430 = vtanh.pop %v318
  %v431 = vtanh.pop %v323
  %v432 = vtanh.pop %v326
  %v433 = vtanh.pop %v331
  %v434 = vtanh.pop %v334
  %v435 = vtanh.pop %v339
  %v436 = vtanh.pop %v342
  %v437 = vtanh.pop %v347
  %v438 = vtanh.pop %v350
  %v439 = vtanh.pop %v355
  %v440 = vtanh.pop %v358
  %v441 = vtanh.pop %v363
  %v442 = vtanh.pop %v366
  %v443 = vtanh.pop %v371
  %v444 = vtanh.pop %v374
  %v445 = vtanh.pop %v379
  %v446 = vtanh.pop %v382
  %v447 = vtanh.pop %v387
  %v448 = vtanh.pop %v390
  %v449 = vtanh.pop %v395
  %v450 = vtanh.pop %v398
  %v451 = vtanh.pop %v403
  %v452 = vtanh.pop %v406
  %v453 = vtanh.pop %v411
  %v454 = vtanh.pop %v414
  %v455 = vld [vmem:[%s3] sm:$0x1]
  %v457 = vlaneseq
  %v458 = vshrl.u32 %v457, 7
  %v459 = vsub.s32 0, %v458
  %v460 = vrot.slane %v455, %v459
  %v462 = vmax.f32 %v417, %v460
  %v463 = vmax.f32 %v418, %v460
  %v464 = vmax.f32 %v419, %v460
  %v465 = vmax.f32 %v420, %v460
  %v466 = vmax.f32 %v421, %v460
  %v467 = vmax.f32 %v422, %v460
  %v468 = vmax.f32 %v423, %v460
  %v469 = vmax.f32 %v424, %v460
  %v470 = vmax.f32 %v425, %v460
  %v471 = vmax.f32 %v426, %v460
  %v472 = vmax.f32 %v427, %v460
  %v473 = vmax.f32 %v428, %v460
  %v474 = vmax.f32 %v429, %v460
  %v475 = vmax.f32 %v430, %v460
  %v476 = vmax.f32 %v431, %v460
  %v477 = vmax.f32 %v432, %v460
  %v478 = vmax.f32 %v433, %v460
  %v479 = vmax.f32 %v434, %v460
  %v480 = vmax.f32 %v435, %v460
  %v481 = vmax.f32 %v436, %v460
  %v482 = vmax.f32 %v437, %v460
  %v483 = vmax.f32 %v438, %v460
  %v484 = vmax.f32 %v439, %v460
  %v485 = vmax.f32 %v440, %v460
  %v486 = vmax.f32 %v441, %v460
  %v487 = vmax.f32 %v442, %v460
  %v488 = vmax.f32 %v443, %v460
  %v489 = vmax.f32 %v444, %v460
  %v490 = vmax.f32 %v445, %v460
  %v491 = vmax.f32 %v446, %v460
  %v492 = vmax.f32 %v447, %v460
  %v493 = vmax.f32 %v448, %v460
  %v494 = vmax.f32 %v449, %v460
  %v495 = vmax.f32 %v450, %v460
  %v496 = vmax.f32 %v451, %v460
  %v497 = vmax.f32 %v452, %v460
  %v498 = vmax.f32 %v453, %v460
  %v499 = vmax.f32 %v454, %v460
  %vm500 = vcmask 48128
  %501 = vst.msk [vmem:[%s4] sm:$0xff] %vm500, %v462
  %502 = vst.msk [vmem:[%s4 + $0x8] sm:$0xff] %vm500, %v463
  %503 = vst.msk [vmem:[%s4 + $0x10] sm:$0xff] %vm500, %v464
  %504 = vst.msk [vmem:[%s4 + $0x18] sm:$0xff] %vm500, %v465
  %505 = vst.msk [vmem:[%s4 + $0x20] sm:$0xff] %vm500, %v466
  %506 = vst.msk [vmem:[%s4 + $0x28] sm:$0xff] %vm500, %v467
  %507 = vst.msk [vmem:[%s4 + $0x30] sm:$0xff] %vm500, %v468
  %508 = vst.msk [vmem:[%s4 + $0x38] sm:$0xff] %vm500, %v469
  %509 = vst.msk [vmem:[%s4 + $0x40] sm:$0xff] %vm500, %v470
  %510 = vst.msk [vmem:[%s4 + $0x48] sm:$0xff] %vm500, %v471
  %511 = vst.msk [vmem:[%s4 + $0x50] sm:$0xff] %vm500, %v472
  %512 = vst.msk [vmem:[%s4 + $0x58] sm:$0xff] %vm500, %v473
  %513 = vst.msk [vmem:[%s4 + $0x60] sm:$0xff] %vm500, %v474
  %514 = vst.msk [vmem:[%s4 + $0x68] sm:$0xff] %vm500, %v475
  %515 = vst.msk [vmem:[%s4 + $0x70] sm:$0xff] %vm500, %v476
  %516 = vst.msk [vmem:[%s4 + $0x78] sm:$0xff] %vm500, %v477
  %517 = vst.msk [vmem:[%s4 + $0x80] sm:$0xff] %vm500, %v478
  %518 = vst.msk [vmem:[%s4 + $0x88] sm:$0xff] %vm500, %v479
  %519 = vst.msk [vmem:[%s4 + $0x90] sm:$0xff] %vm500, %v480
  %520 = vst.msk [vmem:[%s4 + $0x98] sm:$0xff] %vm500, %v481
  %521 = vst.msk [vmem:[%s4 + $0xa0] sm:$0xff] %vm500, %v482
  %522 = vst.msk [vmem:[%s4 + $0xa8] sm:$0xff] %vm500, %v483
  %523 = vst.msk [vmem:[%s4 + $0xb0] sm:$0xff] %vm500, %v484
  %524 = vst.msk [vmem:[%s4 + $0xb8] sm:$0xff] %vm500, %v485
  %525 = vst.msk [vmem:[%s4 + $0xc0] sm:$0xff] %vm500, %v486
  %526 = vst.msk [vmem:[%s4 + $0xc8] sm:$0xff] %vm500, %v487
  %527 = vst.msk [vmem:[%s4 + $0xd0] sm:$0xff] %vm500, %v488
  %528 = vst.msk [vmem:[%s4 + $0xd8] sm:$0xff] %vm500, %v489
  %529 = vst.msk [vmem:[%s4 + $0xe0] sm:$0xff] %vm500, %v490
  %530 = vst.msk [vmem:[%s4 + $0xe8] sm:$0xff] %vm500, %v491
  %531 = vst.msk [vmem:[%s4 + $0xf0] sm:$0xff] %vm500, %v492
  %532 = vst.msk [vmem:[%s4 + $0xf8] sm:$0xff] %vm500, %v493
  %533 = vst.msk [vmem:[%s4 + $0x100] sm:$0xff] %vm500, %v494
  %534 = vst.msk [vmem:[%s4 + $0x108] sm:$0xff] %vm500, %v495
  %535 = vst.msk [vmem:[%s4 + $0x110] sm:$0xff] %vm500, %v496
  %536 = vst.msk [vmem:[%s4 + $0x118] sm:$0xff] %vm500, %v497
  %537 = vst.msk [vmem:[%s4 + $0x120] sm:$0xff] %vm500, %v498
  %vm538 = vcmask 44032
  %539 = vst.msk [vmem:[%s4 + $0x128] sm:$0xf] %vm538, %v499
  // Predicated region
  $region18: #{tpu_custom_call.1} parent=0 // pred_check
    _
  $region19: #{tpu_custom_call.1} parent=0 // pred_check_branch
    %541 = sbr.rel (0) target = $region21
  $region20: #{tpu_custom_call.1} parent=0 // pred_region
    _
  $region21: #{tpu_custom_call.1} parent=0 // pred_fallthru
    _
  // Predicated region
  $region22: #{tpu_custom_call.1} parent=0 // pred_check
    _
  $region23: #{tpu_custom_call.1} parent=0 // pred_check_branch
    %543 = sbr.rel (0) target = $region25
  $region24: #{tpu_custom_call.1} parent=0 // pred_region
    _
  $region25: #{tpu_custom_call.1} parent=0 // pred_fallthru
    _

</llo_original>
